<compile_context>
chip_gen: v5e
topology: v5e:2x2
jax: 0.10.0
libtpu: 0.0.40
codegen_flags: <defaults>
</compile_context>

<pallas_src>
import jax
import jax.numpy as jnp
from jax.experimental import pallas as pl
from jax.experimental.pallas import tpu as pltpu

_LANE = 128


def _round_up(x, m):
    return ((x + m - 1) // m) * m


def _tpu_generation():
    """Best-effort TPU generation detection ('v5e' / 'v6e' / 'v7x' / 'unknown')."""
    kind = ""
    try:
        kind = jax.devices()[0].device_kind.lower()
    except Exception:
        pass
    if "v7" in kind or "7x" in kind:
        return "v7x"
    if "v6" in kind:
        return "v6e"
    if "v5" in kind:
        return "v5e"
    return "unknown"


# ---------------------------------------------------------------------------
# Weight packing (params-only preprocessing; can be cached across forward calls)
# ---------------------------------------------------------------------------
def pack_params(params, input_dim, n_actions, *, mxu_dtype=jnp.float32):
    """Pack MLP parameters into two lane-padded slabs + a static layout table.

      wslab [Rw, Ww] (mxu_dtype) : w1_state, w1_action, w2, ..., w_n   (MXU operands)
      vslab [Rv, Wv] (float32)   : b1, ..., b_n, wq_row, bq            (VPU operands)

    Hidden widths are zero-padded to multiples of 128; the padding is exact because
    padded bias entries are 0, ReLU(0)=0, and the matching rows/cols of downstream
    weights are 0.  Each piece starts on a sublane-tile-aligned row so in-kernel
    static slices stay layout-friendly.
    """
    flat = list(params)
    assert len(flat) >= 4 and len(flat) % 2 == 0
    n_hidden = len(flat) // 2 - 1
    S, A = input_dim, n_actions
    assert flat[0].shape[0] == S + A, "fc1 weight must have input_dim + n_actions rows"

    ws = [flat[2 * i] for i in range(n_hidden)]          # hidden weights, shape (in, out)
    bs = [flat[2 * i + 1] for i in range(n_hidden)]      # hidden biases,  shape (1, out)
    wq, bq = flat[-2], flat[-1]

    h_dims = [w.shape[1] for w in ws]
    hp = [_round_up(h, _LANE) for h in h_dims]           # lane-padded hidden widths

    mxu_dtype = jnp.dtype(mxu_dtype)
    row_align = 8 * max(1, 4 // mxu_dtype.itemsize)      # 8 rows f32, 16 rows bf16, ...

    def pad2(x, rows, cols, dtype):
        x = jnp.asarray(x, dtype)
        return jnp.pad(x, ((0, rows - x.shape[0]), (0, cols - x.shape[1])))

    # ---- matmul-weight slab (mxu_dtype) ----
    w_pieces = [jnp.asarray(ws[0][:S, :], jnp.float32),  # fc1 rows hit by `state`
                jnp.asarray(ws[0][S:, :], jnp.float32)]  # fc1 rows hit by `action`
    w_cols = [hp[0], hp[0]]
    w_rows_used = [S, A]
    for li in range(1, n_hidden):
        w_pieces.append(jnp.asarray(ws[li], jnp.float32))
        w_cols.append(hp[li])
        w_rows_used.append(hp[li - 1])                   # kernel contracts over hp[li-1]
    Ww = max(w_cols)
    w_off, blocks, row = [], [], 0
    for piece, used_rows in zip(w_pieces, w_rows_used):
        rb = _round_up(max(used_rows, piece.shape[0]), row_align)
        blocks.append(pad2(piece, rb, Ww, mxu_dtype))
        w_off.append(row)
        row += rb
    wslab = jnp.concatenate(blocks, axis=0)

    # ---- bias / q-head slab (float32, VPU operands) ----
    Wv = max(hp)
    v_pieces = [jnp.asarray(bs[li], jnp.float32).reshape(1, -1) for li in range(n_hidden)]
    v_pieces.append(jnp.asarray(wq, jnp.float32).reshape(1, -1))   # [1, H_last]
    v_pieces.append(jnp.asarray(bq, jnp.float32).reshape(1, 1))    # [1, 1]
    v_off, blocks, row = [], [], 0
    for piece in v_pieces:
        blocks.append(pad2(piece, 8, Wv, jnp.float32))
        v_off.append(row)
        row += 8
    vslab = jnp.concatenate(blocks, axis=0)

    layout = dict(S=S, A=A, hp=tuple(hp),
                  w_off=tuple(w_off),
                  b_off=tuple(v_off[:n_hidden]),
                  wq_off=v_off[n_hidden], bq_off=v_off[n_hidden + 1])
    return wslab, vslab, layout


# ---------------------------------------------------------------------------
# Kernel
# ---------------------------------------------------------------------------
def _make_critic_kernel(layout, act_dtype):
    """Fused MLP forward over the packed weight slabs.

    Refs: state [tb,S], action [tb,A], wslab [Rw,Ww], vslab [Rv,Wv], q_out [1,tb]
    (batch on the lane axis -> unmasked stores).  All widths are already padded to
    multiples of 128 so every matmul / VPU op is lane-dense.
    """
    S, A = layout["S"], layout["A"]
    hp = layout["hp"]
    w_off = layout["w_off"]
    b_off = layout["b_off"]
    wq_off, bq_off = layout["wq_off"], layout["bq_off"]
    n_hidden = len(hp)
    cast_act = jnp.dtype(act_dtype) != jnp.dtype(jnp.float32)

    def kernel(s_ref, a_ref, w_ref, v_ref, q_ref):
        wdt = w_ref.dtype

        # fc1: split matmul over the concat dims (state part + action part), f32 acc.
        w1s = w_ref[pl.ds(w_off[0], S), pl.ds(0, hp[0])]
        w1a = w_ref[pl.ds(w_off[1], A), pl.ds(0, hp[0])]
        b1 = v_ref[pl.ds(b_off[0], 1), pl.ds(0, hp[0])]
        h = jnp.dot(s_ref[...].astype(wdt), w1s, preferred_element_type=jnp.float32)
        h = h + jnp.dot(a_ref[...].astype(wdt), w1a, preferred_element_type=jnp.float32)
        h = jnp.maximum(h + b1, 0.0)
        if cast_act:
            h = h.astype(act_dtype)        # bf16-resident activations (v6e/v7x path)

        # remaining hidden Linear+ReLU layers (all weights sliced from the same slab)
        for li in range(1, n_hidden):
            w = w_ref[pl.ds(w_off[1 + li], hp[li - 1]), pl.ds(0, hp[li])]
            b = v_ref[pl.ds(b_off[li], 1), pl.ds(0, hp[li])]
            h = jnp.dot(h.astype(wdt), w, preferred_element_type=jnp.float32) + b
            h = jnp.maximum(h, 0.0)
            if cast_act:
                h = h.astype(act_dtype)

        # q head (out_features == 1): VPU multiply + cross-lane reduce instead of an
        # N=1 MXU matmul; result written lane-dense as (1, tb).  Padded lanes of both
        # h and wq are exactly zero.  Elementwise work stays f32 (v5e-safe).
        wq = v_ref[pl.ds(wq_off, 1), pl.ds(0, hp[-1])]
        bq = v_ref[pl.ds(bq_off, 1), pl.ds(0, 1)]
        q_col = jnp.sum(h.astype(jnp.float32) * wq, axis=-1, keepdims=True)   # [tb, 1]
        q_ref[...] = (q_col.reshape(1, -1) + bq).astype(q_ref.dtype)          # [1, tb]

    return kernel


# ---------------------------------------------------------------------------
# Tiling policy + wrapper
# ---------------------------------------------------------------------------
def _pick_batch_tile(B, *, gen, in_features, h_max_pad, act_itemsize,
                     weight_bytes, phys_vmem):
    """Batch tile: single tile for small B; otherwise lane-dense multiples of 128.

    v7x (2 TensorCores): prefer an even number of grid steps so the 'parallel'
    batch axis balances across both cores.  v5e/v6e (1 TC): fewest grid steps that
    fit the VMEM budget (each extra step is ~0.35us of serial overhead)."""
    if B < 256:
        return B
    # Rough per-batch-row working set: double-buffered input tiles + a few live
    # activation copies (h, matmul result, cast) + output.
    per_row = 2 * in_features * 4 + 3 * h_max_pad * max(act_itemsize, 4) + 8
    budget = max(2 << 20, int(phys_vmem * 0.45) - 2 * weight_bytes)
    cap = max(128, min(2048, (budget // per_row) // 128 * 128))
    cands = [t for t in range(cap, 127, -128) if B % t == 0]   # descending 128-multiples
    if gen == "v7x":
        even = [t for t in cands if (B // t) >= 2 and (B // t) % 2 == 0]
        if even:
            return even[0]
    else:
        if B <= cap:
            return B          # one big resident tile on single-TC chips
    if cands:
        return cands[0]
    return B                   # fallback: full batch as a single tile


def critic_forward(state, action, params, *, batch_tile=None, mxu_dtype=jnp.float32,
                   bf16_activations=None, single_buffer_weights=True):
    """Critic forward. state: [B, S], action: [B, A] -> q: [B, 1].

    params: flat tuple (w1, b1, w2, b2, ..., wq, bq) with w of shape (in, out) and
    b of shape (1, out); numerically identical to PyTorch's x @ W.T + b.
    """
    state = jnp.asarray(state, jnp.float32)
    action = jnp.asarray(action, jnp.float32)
    B, S = state.shape
    Ba, A = action.shape
    assert B == Ba

    gen = _tpu_generation()
    phys_vmem = (64 << 20) if gen == "v7x" else (128 << 20)
    mxu_dtype = jnp.dtype(mxu_dtype)

    # Per-generation activation policy: bf16-resident activations help v6e/v7x
    # (bf16 VPU, halves live-vreg/spill bytes); v5e has no bf16 VALUs -> keep f32.
    if bf16_activations is None:
        bf16_activations = gen in ("v6e", "v7x")
    act_dtype = (jnp.bfloat16 if (bf16_activations and mxu_dtype != jnp.float32)
                 else jnp.float32)

    # Weight-only prep (independent of state/action; cacheable across calls).
    wslab, vslab, layout = pack_params(params, S, A, mxu_dtype=mxu_dtype)
    h_max = max(layout["hp"])

    tb = batch_tile if batch_tile is not None else _pick_batch_tile(
        B, gen=gen, in_features=S + A, h_max_pad=h_max,
        act_itemsize=jnp.dtype(act_dtype).itemsize,
        weight_bytes=wslab.nbytes + vslab.nbytes, phys_vmem=phys_vmem)
    assert B % tb == 0, "batch must be divisible by the batch tile"
    assert tb == B or tb % 128 == 0, (
        "batch tile must equal B or be a multiple of 128 (lane-dense output / (8,128) rule)")
    grid = (B // tb,)

    # VMEM budget: only raise the scoped limit when the working set needs it
    # (keeps the small-shape path on compiler defaults).
    est = (2 * (wslab.nbytes + vslab.nbytes)          # weight slabs (worst-case 2 bufs)
           + 2 * tb * (S + A) * 4                     # double-buffered input tiles
           + 2 * tb * 4                               # double-buffered (1, tb) output
           + 4 * tb * h_max * 4)                      # live activations / matmul temps
    vmem_limit = None
    if est > (16 << 20):
        vmem_limit = min(int(est * 1.25) + (4 << 20), int(phys_vmem * 0.9))

    compiler_params = pltpu.CompilerParams(
        dimension_semantics=("parallel",),            # batch axis -> v7x megacore shard
        vmem_limit_bytes=vmem_limit,
    )

    kernel = _make_critic_kernel(layout, act_dtype)

    def build(single_buffer):
        w_kwargs = dict(pipeline_mode=pl.Buffered(1)) if single_buffer else {}
        in_specs = [
            pl.BlockSpec((tb, S), lambda i: (i, 0)),                  # state batch tile
            pl.BlockSpec((tb, A), lambda i: (i, 0)),                  # action batch tile
            pl.BlockSpec(wslab.shape, lambda i: (0, 0), **w_kwargs),  # resident weights
            pl.BlockSpec(vslab.shape, lambda i: (0, 0), **w_kwargs),  # resident biases/q
        ]
        return pl.pallas_call(
            kernel,
            out_shape=jax.ShapeDtypeStruct((1, B), jnp.float32),      # lane-dense slab
            grid_spec=pltpu.PrefetchScalarGridSpec(
                num_scalar_prefetch=0,
                grid=grid,
                in_specs=in_specs,
                out_specs=pl.BlockSpec((1, tb), lambda i: (0, i)),
            ),
            compiler_params=compiler_params,
        )

    if single_buffer_weights:
        try:
            # Buffered(1): the weight slabs have a constant index_map (never refetched),
            # so single-buffering them halves their VMEM footprint at zero pipelining
            # cost.  Guarded so jax versions without single-buffer pipeline_mode support
            # transparently fall back to default double buffering (same results).
            out = jax.block_until_ready(build(True)(state, action, wslab, vslab))
        except Exception:
            out = build(False)(state, action, wslab, vslab)
    else:
        out = build(False)(state, action, wslab, vslab)

    return out.reshape(B, 1)                          # layout plumbing only


# ---------------------------------------------------------------------------
# Reference / params
# ---------------------------------------------------------------------------
def init_params(key, input_dim, n_actions, fc_dims):
    """Deterministic synthetic parameters (PyTorch nn.Linear-like uniform init)."""
    dims = [input_dim + n_actions] + list(fc_dims) + [1]
    params = []
    for li in range(len(dims) - 1):
        fan_in, fan_out = dims[li], dims[li + 1]
        key, kw, kb = jax.random.split(key, 3)
        bound = 1.0 / jnp.sqrt(fan_in)
        w = jax.random.uniform(kw, (fan_in, fan_out), jnp.float32, -bound, bound)
        b = jax.random.uniform(kb, (1, fan_out), jnp.float32, -bound, bound)
        params.extend([w, b])
    return tuple(params)


def reference_forward(state, action, params):
    """Plain-JAX reference identical to the PyTorch forward."""
    x = jnp.concatenate([state, action], axis=1)
    flat = list(params)
    h = x
    for i in range(0, len(flat) - 2, 2):
        h = jax.nn.relu(h @ flat[i] + flat[i + 1])
    return h @ flat[-2] + flat[-1]


if __name__ == "__main__":
    # Small shapes implied by the module: input_dims=[8], n_actions=4, fc_dims=[32, 32]
    B = 8
    INPUT_DIM = 8
    N_ACTIONS = 4
    FC_DIMS = (32, 32)

    key = jax.random.PRNGKey(0)
    k_state, k_action, k_params = jax.random.split(key, 3)

    state = jax.random.normal(k_state, (B, INPUT_DIM), jnp.float32)
    action = jax.random.normal(k_action, (B, N_ACTIONS), jnp.float32)
    params = init_params(k_params, INPUT_DIM, N_ACTIONS, FC_DIMS)

    q_ref = reference_forward(state, action, params)

    # Default f32 MXU path: exact-tolerance check (lane padding is numerically exact).
    q = jax.block_until_ready(critic_forward(state, action, params))
    assert q.shape == (B, 1)
    assert jnp.allclose(q, q_ref, atol=1e-5, rtol=1e-5), (q, q_ref)

    # bf16 MXU path (f32 accumulation); looser tolerance reflects expected bf16 rounding.
    q_bf16 = jax.block_until_ready(
        critic_forward(state, action, params, mxu_dtype=jnp.bfloat16))
    assert q_bf16.shape == (B, 1)
    assert jnp.allclose(q_bf16, q_ref, atol=0.15, rtol=0.15), (q_bf16, q_ref)

    # TODO(synk): checkpoint save/load and the Adam optimizer are training-side PyTorch
    # machinery with no forward-pass Pallas equivalent; intentionally not translated.
    print("KERNEL_OK")
</pallas_src>

<mosaic_0001>
module attributes {stable_mosaic.version = 11 : i64} {
  func.func @kernel(%arg0: i32, %arg1: memref<8x8xf32, #tpu.memory_space<vmem>>, %arg2: memref<8x4xf32, #tpu.memory_space<vmem>>, %arg3: memref<144x128xf32, #tpu.memory_space<vmem>>, %arg4: memref<32x128xf32, #tpu.memory_space<vmem>>, %arg5: memref<1x8xf32, #tpu.memory_space<vmem>>) attributes {dimension_semantics = [#tpu.dimension_semantics<parallel>], iteration_bounds = array<i64: 1>, scalar_prefetch = 0 : i64, scratch_operands = 0 : i64, tpu.core_type = #tpu.core_type<tc>, window_params = [{transform_indices = @transform_0, window_bounds = array<i64: 8, 8>}, {transform_indices = @transform_1, window_bounds = array<i64: 8, 4>}, {pipeline_mode = #tpu.pipeline_mode<synchronous>, transform_indices = @transform_2, window_bounds = array<i64: 144, 128>}, {pipeline_mode = #tpu.pipeline_mode<synchronous>, transform_indices = @transform_3, window_bounds = array<i64: 32, 128>}, {transform_indices = @transform_4, window_bounds = array<i64: 1, 8>}]} {
    %c0 = arith.constant 0 : index
    %c0_0 = arith.constant 0 : index
    %0 = vector.load %arg3[%c0, %c0_0] : memref<144x128xf32, #tpu.memory_space<vmem>>, vector<8x128xf32>
    %c8 = arith.constant 8 : index
    %c0_1 = arith.constant 0 : index
    %1 = vector.load %arg3[%c8, %c0_1] : memref<144x128xf32, #tpu.memory_space<vmem>>, vector<4x128xf32>
    %c0_2 = arith.constant 0 : index
    %c0_3 = arith.constant 0 : index
    %2 = vector.load %arg4[%c0_2, %c0_3] : memref<32x128xf32, #tpu.memory_space<vmem>>, vector<1x128xf32>
    %c0_4 = arith.constant 0 : index
    %c0_5 = arith.constant 0 : index
    %3 = vector.load %arg1[%c0_4, %c0_5] : memref<8x8xf32, #tpu.memory_space<vmem>>, vector<8x8xf32>
    %cst = arith.constant dense<0.000000e+00> : vector<8x128xf32>
    %4 = tpu.matmul %3, %0, %cst {dimension_numbers = #tpu.dot_dimension_numbers<[1], [0], [0], [1], [0, 0, 1, 1], [], []>} : vector<8x8xf32>, vector<8x128xf32>, vector<8x128xf32> -> vector<8x128xf32>
    %c0_6 = arith.constant 0 : index
    %c0_7 = arith.constant 0 : index
    %5 = vector.load %arg2[%c0_6, %c0_7] : memref<8x4xf32, #tpu.memory_space<vmem>>, vector<8x4xf32>
    %cst_8 = arith.constant dense<0.000000e+00> : vector<8x128xf32>
    %6 = tpu.matmul %5, %1, %cst_8 {dimension_numbers = #tpu.dot_dimension_numbers<[1], [0], [0], [1], [0, 0, 1, 1], [], []>} : vector<8x4xf32>, vector<4x128xf32>, vector<8x128xf32> -> vector<8x128xf32>
    %7 = arith.addf %4, %6 : vector<8x128xf32>
    %8 = vector.broadcast %2 : vector<1x128xf32> to vector<8x128xf32>
    %9 = arith.addf %7, %8 : vector<8x128xf32>
    %cst_9 = arith.constant 0.000000e+00 : f32
    %10 = vector.broadcast %cst_9 : f32 to vector<8x128xf32>
    %11 = arith.maximumf %9, %10 : vector<8x128xf32>
    %c16 = arith.constant 16 : index
    %c0_10 = arith.constant 0 : index
    %12 = vector.load %arg3[%c16, %c0_10] : memref<144x128xf32, #tpu.memory_space<vmem>>, vector<128x128xf32>
    %c8_11 = arith.constant 8 : index
    %c0_12 = arith.constant 0 : index
    %13 = vector.load %arg4[%c8_11, %c0_12] : memref<32x128xf32, #tpu.memory_space<vmem>>, vector<1x128xf32>
    %cst_13 = arith.constant dense<0.000000e+00> : vector<8x128xf32>
    %14 = tpu.matmul %11, %12, %cst_13 {dimension_numbers = #tpu.dot_dimension_numbers<[1], [0], [0], [1], [0, 0, 1, 1], [], []>} : vector<8x128xf32>, vector<128x128xf32>, vector<8x128xf32> -> vector<8x128xf32>
    %15 = vector.broadcast %13 : vector<1x128xf32> to vector<8x128xf32>
    %16 = arith.addf %14, %15 : vector<8x128xf32>
    %cst_14 = arith.constant 0.000000e+00 : f32
    %17 = vector.broadcast %cst_14 : f32 to vector<8x128xf32>
    %18 = arith.maximumf %16, %17 : vector<8x128xf32>
    %c16_15 = arith.constant 16 : index
    %c0_16 = arith.constant 0 : index
    %19 = vector.load %arg4[%c16_15, %c0_16] : memref<32x128xf32, #tpu.memory_space<vmem>>, vector<1x128xf32>
    %c24 = arith.constant 24 : index
    %c0_17 = arith.constant 0 : index
    %20 = vector.load %arg4[%c24, %c0_17] : memref<32x128xf32, #tpu.memory_space<vmem>>, vector<1x1xf32>
    %21 = vector.broadcast %19 : vector<1x128xf32> to vector<8x128xf32>
    %22 = arith.mulf %18, %21 : vector<8x128xf32>
    %cst_18 = arith.constant dense<0.000000e+00> : vector<8xf32>
    %23 = vector.multi_reduction <add>, %22, %cst_18 [1] : vector<8x128xf32> to vector<8xf32>
    %24 = vector.shape_cast %23 : vector<8xf32> to vector<8x1xf32>
    %25 = vector.shape_cast %24 : vector<8x1xf32> to vector<1x8xf32>
    %26 = vector.broadcast %20 : vector<1x1xf32> to vector<1x8xf32>
    %27 = arith.addf %25, %26 : vector<1x8xf32>
    %c0_19 = arith.constant 0 : index
    %c0_20 = arith.constant 0 : index
    %28 = vector.load %arg5[%c0_19, %c0_20] : memref<1x8xf32, #tpu.memory_space<vmem>>, vector<1x8xf32>
    tpu.vector_store %arg5[%c0_19, %c0_20], %27 {strides = array<i32>} : memref<1x8xf32, #tpu.memory_space<vmem>>, vector<1x8xf32>,
    return
  }
  func.func @transform_0(%arg0: i32) -> (i32, i32) {
    %c0_i32 = arith.constant 0 : i32
    %c0_i32_0 = arith.constant 0 : i32
    return %arg0, %c0_i32 : i32, i32
  }
  func.func @transform_1(%arg0: i32) -> (i32, i32) {
    %c0_i32 = arith.constant 0 : i32
    %c0_i32_0 = arith.constant 0 : i32
    return %arg0, %c0_i32 : i32, i32
  }
  func.func @transform_2(%arg0: i32) -> (i32, i32) {
    %c0_i32 = arith.constant 0 : i32
    %c0_i32_0 = arith.constant 0 : i32
    %c0_i32_1 = arith.constant 0 : i32
    return %c0_i32, %c0_i32_0 : i32, i32
  }
  func.func @transform_3(%arg0: i32) -> (i32, i32) {
    %c0_i32 = arith.constant 0 : i32
    %c0_i32_0 = arith.constant 0 : i32
    %c0_i32_1 = arith.constant 0 : i32
    return %c0_i32, %c0_i32_0 : i32, i32
  }
  func.func @transform_4(%arg0: i32) -> (i32, i32) {
    %c0_i32 = arith.constant 0 : i32
    %c0_i32_0 = arith.constant 0 : i32
    return %c0_i32, %arg0 : i32, i32
  }
}

module attributes {stable_mosaic.version = 11 : i64} {
  func.func @kernel(%arg0: i32, %arg1: memref<8x8xf32, #tpu.memory_space<vmem>>, %arg2: memref<8x4xf32, #tpu.memory_space<vmem>>, %arg3: memref<144x128xf32, #tpu.memory_space<vmem>>, %arg4: memref<32x128xf32, #tpu.memory_space<vmem>>, %arg5: memref<1x8xf32, #tpu.memory_space<vmem>>) attributes {dimension_semantics = [#tpu.dimension_semantics<parallel>], iteration_bounds = array<i64: 1>, scalar_prefetch = 0 : i64, scratch_operands = 0 : i64, tpu.core_type = #tpu.core_type<tc>, window_params = [{transform_indices = @transform_0, window_bounds = array<i64: 8, 8>}, {transform_indices = @transform_1, window_bounds = array<i64: 8, 4>}, {pipeline_mode = #tpu.pipeline_mode<synchronous>, transform_indices = @transform_2, window_bounds = array<i64: 144, 128>}, {pipeline_mode = #tpu.pipeline_mode<synchronous>, transform_indices = @transform_3, window_bounds = array<i64: 32, 128>}, {transform_indices = @transform_4, window_bounds = array<i64: 1, 8>}]} {
    %c0 = arith.constant 0 : index
    %c0_0 = arith.constant 0 : index
    %0 = vector.load %arg3[%c0, %c0_0] : memref<144x128xf32, #tpu.memory_space<vmem>>, vector<8x128xf32>
    %c8 = arith.constant 8 : index
    %c0_1 = arith.constant 0 : index
    %1 = vector.load %arg3[%c8, %c0_1] : memref<144x128xf32, #tpu.memory_space<vmem>>, vector<4x128xf32>
    %c0_2 = arith.constant 0 : index
    %c0_3 = arith.constant 0 : index
    %2 = vector.load %arg4[%c0_2, %c0_3] : memref<32x128xf32, #tpu.memory_space<vmem>>, vector<1x128xf32>
    %c0_4 = arith.constant 0 : index
    %c0_5 = arith.constant 0 : index
    %3 = vector.load %arg1[%c0_4, %c0_5] : memref<8x8xf32, #tpu.memory_space<vmem>>, vector<8x8xf32>
    %cst = arith.constant dense<0.000000e+00> : vector<8x128xf32>
    %4 = tpu.matmul %3, %0, %cst {dimension_numbers = #tpu.dot_dimension_numbers<[1], [0], [0], [1], [0, 0, 1, 1], [], []>} : vector<8x8xf32>, vector<8x128xf32>, vector<8x128xf32> -> vector<8x128xf32>
    %c0_6 = arith.constant 0 : index
    %c0_7 = arith.constant 0 : index
    %5 = vector.load %arg2[%c0_6, %c0_7] : memref<8x4xf32, #tpu.memory_space<vmem>>, vector<8x4xf32>
    %cst_8 = arith.constant dense<0.000000e+00> : vector<8x128xf32>
    %6 = tpu.matmul %5, %1, %cst_8 {dimension_numbers = #tpu.dot_dimension_numbers<[1], [0], [0], [1], [0, 0, 1, 1], [], []>} : vector<8x4xf32>, vector<4x128xf32>, vector<8x128xf32> -> vector<8x128xf32>
    %7 = arith.addf %4, %6 : vector<8x128xf32>
    %8 = vector.broadcast %2 : vector<1x128xf32> to vector<8x128xf32>
    %9 = arith.addf %7, %8 : vector<8x128xf32>
    %cst_9 = arith.constant 0.000000e+00 : f32
    %10 = vector.broadcast %cst_9 : f32 to vector<8x128xf32>
    %11 = arith.maximumf %9, %10 : vector<8x128xf32>
    %c16 = arith.constant 16 : index
    %c0_10 = arith.constant 0 : index
    %12 = vector.load %arg3[%c16, %c0_10] : memref<144x128xf32, #tpu.memory_space<vmem>>, vector<128x128xf32>
    %c8_11 = arith.constant 8 : index
    %c0_12 = arith.constant 0 : index
    %13 = vector.load %arg4[%c8_11, %c0_12] : memref<32x128xf32, #tpu.memory_space<vmem>>, vector<1x128xf32>
    %cst_13 = arith.constant dense<0.000000e+00> : vector<8x128xf32>
    %14 = tpu.matmul %11, %12, %cst_13 {dimension_numbers = #tpu.dot_dimension_numbers<[1], [0], [0], [1], [0, 0, 1, 1], [], []>} : vector<8x128xf32>, vector<128x128xf32>, vector<8x128xf32> -> vector<8x128xf32>
    %15 = vector.broadcast %13 : vector<1x128xf32> to vector<8x128xf32>
    %16 = arith.addf %14, %15 : vector<8x128xf32>
    %cst_14 = arith.constant 0.000000e+00 : f32
    %17 = vector.broadcast %cst_14 : f32 to vector<8x128xf32>
    %18 = arith.maximumf %16, %17 : vector<8x128xf32>
    %c16_15 = arith.constant 16 : index
    %c0_16 = arith.constant 0 : index
    %19 = vector.load %arg4[%c16_15, %c0_16] : memref<32x128xf32, #tpu.memory_space<vmem>>, vector<1x128xf32>
    %c24 = arith.constant 24 : index
    %c0_17 = arith.constant 0 : index
    %20 = vector.load %arg4[%c24, %c0_17] : memref<32x128xf32, #tpu.memory_space<vmem>>, vector<1x1xf32>
    %21 = vector.broadcast %19 : vector<1x128xf32> to vector<8x128xf32>
    %22 = arith.mulf %18, %21 : vector<8x128xf32>
    %cst_18 = arith.constant dense<0.000000e+00> : vector<8xf32>
    %23 = vector.multi_reduction <add>, %22, %cst_18 [1] : vector<8x128xf32> to vector<8xf32>
    %24 = vector.shape_cast %23 : vector<8xf32> to vector<8x1xf32>
    %25 = vector.shape_cast %24 : vector<8x1xf32> to vector<1x8xf32>
    %26 = vector.broadcast %20 : vector<1x1xf32> to vector<1x8xf32>
    %27 = arith.addf %25, %26 : vector<1x8xf32>
    %c0_19 = arith.constant 0 : index
    %c0_20 = arith.constant 0 : index
    %28 = vector.load %arg5[%c0_19, %c0_20] : memref<1x8xf32, #tpu.memory_space<vmem>>, vector<1x8xf32>
    tpu.vector_store %arg5[%c0_19, %c0_20], %27 {strides = array<i32>} : memref<1x8xf32, #tpu.memory_space<vmem>>, vector<1x8xf32>,
    return
  }
  func.func @transform_0(%arg0: i32) -> (i32, i32) {
    %c0_i32 = arith.constant 0 : i32
    %c0_i32_0 = arith.constant 0 : i32
    return %arg0, %c0_i32 : i32, i32
  }
  func.func @transform_1(%arg0: i32) -> (i32, i32) {
    %c0_i32 = arith.constant 0 : i32
    %c0_i32_0 = arith.constant 0 : i32
    return %arg0, %c0_i32 : i32, i32
  }
  func.func @transform_2(%arg0: i32) -> (i32, i32) {
    %c0_i32 = arith.constant 0 : i32
    %c0_i32_0 = arith.constant 0 : i32
    %c0_i32_1 = arith.constant 0 : i32
    return %c0_i32, %c0_i32_0 : i32, i32
  }
  func.func @transform_3(%arg0: i32) -> (i32, i32) {
    %c0_i32 = arith.constant 0 : i32
    %c0_i32_0 = arith.constant 0 : i32
    %c0_i32_1 = arith.constant 0 : i32
    return %c0_i32, %c0_i32_0 : i32, i32
  }
  func.func @transform_4(%arg0: i32) -> (i32, i32) {
    %c0_i32 = arith.constant 0 : i32
    %c0_i32_0 = arith.constant 0 : i32
    return %c0_i32, %arg0 : i32, i32
  }
}

</mosaic_0001>

<llo_original>
// kernel: tpu_custom_call.1
$region0: #{tpu_custom_call.1}
  #allocation0 [shape = 'u32[]', space=smem, size = 0x4, offset = 0x4, fixed_abs, tag = 'smem constant byte address 0x4 - core index']
  #allocation1 [shape = 'u32[72,128]{1,0:T(1,128)}', space=vmem, size = 0x9000, scoped, tag = 'internal scratch']
  %s0 = inlined_call_operand.vmem [shape: f32[8,8], index: 0, kind: input, shape index: {}]
  %s1 = inlined_call_operand.vmem [shape: f32[8,4], index: 1, kind: input, shape index: {}]
  %s2 = inlined_call_operand.hbm [shape: f32[144,128], index: 2, kind: input, shape index: {}]
  %s3 = inlined_call_operand.hbm [shape: f32[32,128], index: 3, kind: input, shape index: {}]
  %s4 = inlined_call_operand.hbm [shape: f32[1,8], index: 4, kind: output, shape index: {}]
  %s5 = sld [smem:[#allocation0]]
  $region34: #{tpu_custom_call.1} parent=0
    _
  %s7 = ssub.s32 1, %s5
  %s8 = scalar_select 0, %s7, %s5
  $region1: #{tpu_custom_call.1} parent=0
    #allocation2 [shape = 'u8[73728]{0}', space=vmem, size = 0x12000, scoped, tag = 'input window, operand 2, single buffered']
    #allocation3 [shape = 's32[1]{0}', space=sflag, size = 0x4, scoped, tag = 'scoped memory for tpu_custom_call.1']
    #allocation4 [shape = 's32[1]{0}', space=sflag, size = 0x4, scoped, tag = 'scoped memory for tpu_custom_call.1']
    #allocation5 [shape = 'u8[16384]{0}', space=vmem, size = 0x4000, scoped, tag = 'input window, operand 3, single buffered']
    #allocation6 [shape = 's32[1]{0}', space=sflag, size = 0x4, scoped, tag = 'scoped memory for tpu_custom_call.1']
    #allocation7 [shape = 'u8[512]{0}', space=vmem, size = 0x400, scoped, tag = 'output window, operand 0, single buffered']
    %9 = vsyncpa [#allocation3], 0
    %10 = vsyncpa [#allocation6], 0
    %11 = vsyncpa [#allocation4], 0
    // Predicated region
    $region2: #{tpu_custom_call.1} parent=1 // pred_check
      _
    $region3: #{tpu_custom_call.1} parent=1 // pred_check_branch
      %13 = sbr.rel (0) target = $region5
    $region4: #{tpu_custom_call.1} parent=1 // pred_region
      _
    $region5: #{tpu_custom_call.1} parent=1 // pred_fallthru
      _
    // Predicated region
    $region6: #{tpu_custom_call.1} parent=1 // pred_check
      _
    $region7: #{tpu_custom_call.1} parent=1 // pred_check_branch
      %15 = sbr.rel (0) target = $region9
    $region8: #{tpu_custom_call.1} parent=1 // pred_region
      _
    $region9: #{tpu_custom_call.1} parent=1 // pred_fallthru
      _
    // Predicated region
    $region10: #{tpu_custom_call.1} parent=1 // pred_check
      _
    $region11: #{tpu_custom_call.1} parent=1 // pred_check_branch
      %17 = sbr.rel (0) target = $region13
    $region12: #{tpu_custom_call.1} parent=1 // pred_region
      %19 = vsyncadd [#allocation3], 0
      %s20 = sshll.u32 %s2, 4
      %s21 = int_to_ptr.hbm [resolvable:$true] %s20
      %s22 = sshll.u32 [#allocation2], 4
      %s23 = int_to_ptr.vmem [resolvable:$true] %s22
      %28 = dma.hbm_to_vmem [thread:$0]  %s21, 2304, %s23, [#allocation3], 128, 128, 8
    $region13: #{tpu_custom_call.1} parent=1 // pred_fallthru
      _
    // Predicated region
    $region14: #{tpu_custom_call.1} parent=1 // pred_check
      _
    $region15: #{tpu_custom_call.1} parent=1 // pred_check_branch
      %30 = sbr.rel (0) target = $region17
    $region16: #{tpu_custom_call.1} parent=1 // pred_region
      %32 = vsyncadd [#allocation6], 0
      %s33 = sshll.u32 %s3, 4
      %s34 = int_to_ptr.hbm [resolvable:$true] %s33
      %s35 = sshll.u32 [#allocation5], 4
      %s36 = int_to_ptr.vmem [resolvable:$true] %s35
      %41 = dma.hbm_to_vmem [thread:$0]  %s34, 512, %s36, [#allocation6], 128, 128, 8
    $region17: #{tpu_custom_call.1} parent=1 // pred_fallthru
      _
    // Predicated region
    $region18: #{tpu_custom_call.1} parent=1 // pred_check
      _
    $region19: #{tpu_custom_call.1} parent=1 // pred_check_branch
      %43 = sbr.rel (0) target = $region21
    $region20: #{tpu_custom_call.1} parent=1 // pred_region
      %45 = dma.done [#allocation3], 2304
    $region21: #{tpu_custom_call.1} parent=1 // pred_fallthru
      _
    // Predicated region
    $region22: #{tpu_custom_call.1} parent=1 // pred_check
      _
    $region23: #{tpu_custom_call.1} parent=1 // pred_check_branch
      %47 = sbr.rel (0) target = $region25
    $region24: #{tpu_custom_call.1} parent=1 // pred_region
      %49 = dma.done [#allocation6], 512
    $region25: #{tpu_custom_call.1} parent=1 // pred_fallthru
      _
    %v50 = vld [vmem:[#allocation2] sm:$0xff]
    %v51 = vld [vmem:[#allocation2 + $0x8] sm:$0xf]
    %v52 = vld [vmem:[#allocation5] sm:$0x1]
    %v53 = vld [vmem:[%s0] sm:$0xff]
    %v54 = vld [vmem:[%s1] sm:$0xff]
    %vm55 = vcmask 31744
    %v57 = vsel %vm55, %v54, 0
    %vm59 = vcmask 1043456
    %v61 = vsel %vm59, %v51, 0
    %63 = vmatpush.msra.mxu0 0.0
    %64 = vmatpush.msra.mxu0 0.0
    %65 = vmatpush.msra.mxu0 0.0
    %66 = vmatpush.msra.mxu0 0.0
    %67 = vmatpush.msra.mxu0 0.0
    %68 = vmatpush.msra.mxu0 0.0
    %69 = vmatpush.msra.mxu0 0.0
    %70 = vmatpush.msra.mxu0 0.0
    %71 = vmatpush.msra.mxu0 0.0
    %72 = vmatpush.msra.mxu0 0.0
    %73 = vmatpush.msra.mxu0 0.0
    %74 = vmatpush.msra.mxu0 0.0
    %75 = vmatpush.msra.mxu0 0.0
    %76 = vmatpush.msra.mxu0 0.0
    %77 = vmatpush.msra.mxu0 0.0
    %78 = vmatpush.msra.mxu0 %v61
    %79 = vmatmul.f32.gmra.mxu0 %v57
    %v80 = vpop.f32.mrf.mxu0
    %v81 = vadd.f32 0.0, %v80
    %82 = vdwg.mxu0
    %vm83 = vcmask 64512
    %v85 = vsel %vm83, %v53, 0
    %87 = vmatpush.msra.mxu0 0.0
    %88 = vmatpush.msra.mxu0 0.0
    %89 = vmatpush.msra.mxu0 0.0
    %90 = vmatpush.msra.mxu0 0.0
    %91 = vmatpush.msra.mxu0 0.0
    %92 = vmatpush.msra.mxu0 0.0
    %93 = vmatpush.msra.mxu0 0.0
    %94 = vmatpush.msra.mxu0 0.0
    %95 = vmatpush.msra.mxu0 0.0
    %96 = vmatpush.msra.mxu0 0.0
    %97 = vmatpush.msra.mxu0 0.0
    %98 = vmatpush.msra.mxu0 0.0
    %99 = vmatpush.msra.mxu0 0.0
    %100 = vmatpush.msra.mxu0 0.0
    %101 = vmatpush.msra.mxu0 0.0
    %102 = vmatpush.msra.mxu0 %v50
    %103 = vmatmul.f32.gmra.mxu0 %v85
    %v104 = vpop.f32.mrf.mxu0
    %v105 = vadd.f32 %v81, %v104
    %106 = vdwg.mxu0
    %v107 = vperm.slane %v52, 0
    %v108 = vadd.f32 %v105, %v107
    %v109 = vmax.f32 %v108, 0.0
    %v110 = vld [vmem:[#allocation2 + $0x10] sm:$0xff]
    %v111 = vld [vmem:[#allocation2 + $0x18] sm:$0xff]
    %v112 = vld [vmem:[#allocation2 + $0x20] sm:$0xff]
    %v113 = vld [vmem:[#allocation2 + $0x28] sm:$0xff]
    %v114 = vld [vmem:[#allocation2 + $0x30] sm:$0xff]
    %v115 = vld [vmem:[#allocation2 + $0x38] sm:$0xff]
    %v116 = vld [vmem:[#allocation2 + $0x40] sm:$0xff]
    %v117 = vld [vmem:[#allocation2 + $0x48] sm:$0xff]
    %v118 = vld [vmem:[#allocation2 + $0x50] sm:$0xff]
    %v119 = vld [vmem:[#allocation2 + $0x58] sm:$0xff]
    %v120 = vld [vmem:[#allocation2 + $0x60] sm:$0xff]
    %v121 = vld [vmem:[#allocation2 + $0x68] sm:$0xff]
    %v122 = vld [vmem:[#allocation2 + $0x70] sm:$0xff]
    %v123 = vld [vmem:[#allocation2 + $0x78] sm:$0xff]
    %v124 = vld [vmem:[#allocation2 + $0x80] sm:$0xff]
    %v125 = vld [vmem:[#allocation2 + $0x88] sm:$0xff]
    %v126 = vld [vmem:[#allocation5 + $0x8] sm:$0x1]
    %v127 = vperm.slane %v126, 0
    %128 = vmatpush.msra.mxu0 %v125
    %129 = vmatpush.msra.mxu0 %v124
    %130 = vmatpush.msra.mxu0 %v123
    %131 = vmatpush.msra.mxu0 %v122
    %132 = vmatpush.msra.mxu0 %v121
    %133 = vmatpush.msra.mxu0 %v120
    %134 = vmatpush.msra.mxu0 %v119
    %135 = vmatpush.msra.mxu0 %v118
    %136 = vmatpush.msra.mxu0 %v117
    %137 = vmatpush.msra.mxu0 %v116
    %138 = vmatpush.msra.mxu0 %v115
    %139 = vmatpush.msra.mxu0 %v114
    %140 = vmatpush.msra.mxu0 %v113
    %141 = vmatpush.msra.mxu0 %v112
    %142 = vmatpush.msra.mxu0 %v111
    %143 = vmatpush.msra.mxu0 %v110
    %144 = vmatmul.f32.gmra.mxu0 %v109
    %v145 = vpop.f32.mrf.mxu0
    %v146 = vadd.f32 %v127, %v145
    %147 = vdwg.mxu0
    %v148 = vmax.f32 %v146, 0.0
    %v149 = vld [vmem:[#allocation5 + $0x10] sm:$0x1]
    %v150 = vld [vmem:[#allocation5 + $0x18] sm:$0x1]
    %v151 = vperm.slane %v149, 0
    %v152 = vmul.f32 %v148, %v151
    %153 = vadd.xlane.f32.xlu0 %v152
    %v154 = vpop.xlane.xlu0 %153
    %156 = vset.pattern.permute.xlu0 0
    %157 = vperm.xlu0 %156, %v150
    %v158 = vpop.permute.xlu0 %157
    %v159 = vperm.slane %v158, 0
    %v161 = vadd.f32 %v154, %v159
    %163 = vset.pattern.permute.xlu0 0
    %164 = vperm.xlu0 %163, %v161
    %v165 = vpop.permute.xlu0 %164
    %v166 = vlaneseq
    %v167 = vand.u32 %v166, 127
    %v168 = vperm.slane %v165, %v167
    %vm170 = vcmask 57344
    %171 = vst.msk [vmem:[#allocation7] sm:$0x1] %vm170, %v168
    // Predicated region
    $region26: #{tpu_custom_call.1} parent=1 // pred_check
      _
    $region27: #{tpu_custom_call.1} parent=1 // pred_check_branch
      %173 = sbr.rel (0) target = $region29
    $region28: #{tpu_custom_call.1} parent=1 // pred_region
      %175 = vsyncadd [#allocation4], 0
      %s177 = sshll.u32 [#allocation7], 4
      %s178 = int_to_ptr.vmem [resolvable:$true] %s177
      %s179 = sshll.u32 %s4, 4
      %s180 = int_to_ptr.hbm [resolvable:$true] %s179
      %182 = dma.vmem_to_hbm [thread:$0]  %s178, 16, %s180, [#allocation4]
    $region29: #{tpu_custom_call.1} parent=1 // pred_fallthru
      _
    // Predicated region
    $region30: #{tpu_custom_call.1} parent=1 // pred_check
      _
    $region31: #{tpu_custom_call.1} parent=1 // pred_check_branch
      %184 = sbr.rel (0) target = $region33
    $region32: #{tpu_custom_call.1} parent=1 // pred_region
      %186 = dma.done [#allocation4], 16
    $region33: #{tpu_custom_call.1} parent=1 // pred_fallthru
      _
    %187 = vsyncpa [#allocation3], 1
    %188 = vsyncpa [#allocation6], 1
    %189 = vsyncpa [#allocation4], 1

// kernel: tpu_custom_call.1
$region0: #{tpu_custom_call.1}
  #allocation0 [shape = 'u32[]', space=smem, size = 0x4, offset = 0x4, fixed_abs, tag = 'smem constant byte address 0x4 - core index']
  #allocation1 [shape = 'u32[72,128]{1,0:T(1,128)}', space=vmem, size = 0x9000, scoped, tag = 'internal scratch']
  %s0 = inlined_call_operand.vmem [shape: f32[8,8], index: 0, kind: input, shape index: {}]
  %s1 = inlined_call_operand.vmem [shape: f32[8,4], index: 1, kind: input, shape index: {}]
  %s2 = inlined_call_operand.hbm [shape: f32[144,128], index: 2, kind: input, shape index: {}]
  %s3 = inlined_call_operand.hbm [shape: f32[32,128], index: 3, kind: input, shape index: {}]
  %s4 = inlined_call_operand.hbm [shape: f32[1,8], index: 4, kind: output, shape index: {}]
  %s5 = sld [smem:[#allocation0]]
  $region34: #{tpu_custom_call.1} parent=0
    _
  %s7 = ssub.s32 1, %s5
  %s8 = scalar_select 0, %s7, %s5
  $region1: #{tpu_custom_call.1} parent=0
    #allocation2 [shape = 'u8[73728]{0}', space=vmem, size = 0x12000, scoped, tag = 'input window, operand 2, single buffered']
    #allocation3 [shape = 's32[1]{0}', space=sflag, size = 0x4, scoped, tag = 'scoped memory for tpu_custom_call.1']
    #allocation4 [shape = 's32[1]{0}', space=sflag, size = 0x4, scoped, tag = 'scoped memory for tpu_custom_call.1']
    #allocation5 [shape = 'u8[16384]{0}', space=vmem, size = 0x4000, scoped, tag = 'input window, operand 3, single buffered']
    #allocation6 [shape = 's32[1]{0}', space=sflag, size = 0x4, scoped, tag = 'scoped memory for tpu_custom_call.1']
    #allocation7 [shape = 'u8[512]{0}', space=vmem, size = 0x400, scoped, tag = 'output window, operand 0, single buffered']
    %9 = vsyncpa [#allocation3], 0
    %10 = vsyncpa [#allocation6], 0
    %11 = vsyncpa [#allocation4], 0
    // Predicated region
    $region2: #{tpu_custom_call.1} parent=1 // pred_check
      _
    $region3: #{tpu_custom_call.1} parent=1 // pred_check_branch
      %13 = sbr.rel (0) target = $region5
    $region4: #{tpu_custom_call.1} parent=1 // pred_region
      _
    $region5: #{tpu_custom_call.1} parent=1 // pred_fallthru
      _
    // Predicated region
    $region6: #{tpu_custom_call.1} parent=1 // pred_check
      _
    $region7: #{tpu_custom_call.1} parent=1 // pred_check_branch
      %15 = sbr.rel (0) target = $region9
    $region8: #{tpu_custom_call.1} parent=1 // pred_region
      _
    $region9: #{tpu_custom_call.1} parent=1 // pred_fallthru
      _
    // Predicated region
    $region10: #{tpu_custom_call.1} parent=1 // pred_check
      _
    $region11: #{tpu_custom_call.1} parent=1 // pred_check_branch
      %17 = sbr.rel (0) target = $region13
    $region12: #{tpu_custom_call.1} parent=1 // pred_region
      %19 = vsyncadd [#allocation3], 0
      %s20 = sshll.u32 %s2, 4
      %s21 = int_to_ptr.hbm [resolvable:$true] %s20
      %s22 = sshll.u32 [#allocation2], 4
      %s23 = int_to_ptr.vmem [resolvable:$true] %s22
      %28 = dma.hbm_to_vmem [thread:$0]  %s21, 2304, %s23, [#allocation3], 128, 128, 8
    $region13: #{tpu_custom_call.1} parent=1 // pred_fallthru
      _
    // Predicated region
    $region14: #{tpu_custom_call.1} parent=1 // pred_check
      _
    $region15: #{tpu_custom_call.1} parent=1 // pred_check_branch
      %30 = sbr.rel (0) target = $region17
    $region16: #{tpu_custom_call.1} parent=1 // pred_region
      %32 = vsyncadd [#allocation6], 0
      %s33 = sshll.u32 %s3, 4
      %s34 = int_to_ptr.hbm [resolvable:$true] %s33
      %s35 = sshll.u32 [#allocation5], 4
      %s36 = int_to_ptr.vmem [resolvable:$true] %s35
      %41 = dma.hbm_to_vmem [thread:$0]  %s34, 512, %s36, [#allocation6], 128, 128, 8
    $region17: #{tpu_custom_call.1} parent=1 // pred_fallthru
      _
    // Predicated region
    $region18: #{tpu_custom_call.1} parent=1 // pred_check
      _
    $region19: #{tpu_custom_call.1} parent=1 // pred_check_branch
      %43 = sbr.rel (0) target = $region21
    $region20: #{tpu_custom_call.1} parent=1 // pred_region
      %45 = dma.done [#allocation3], 2304
    $region21: #{tpu_custom_call.1} parent=1 // pred_fallthru
      _
    // Predicated region
    $region22: #{tpu_custom_call.1} parent=1 // pred_check
      _
    $region23: #{tpu_custom_call.1} parent=1 // pred_check_branch
      %47 = sbr.rel (0) target = $region25
    $region24: #{tpu_custom_call.1} parent=1 // pred_region
      %49 = dma.done [#allocation6], 512
    $region25: #{tpu_custom_call.1} parent=1 // pred_fallthru
      _
    %v50 = vld [vmem:[#allocation2] sm:$0xff]
    %v51 = vld [vmem:[#allocation2 + $0x8] sm:$0xf]
    %v52 = vld [vmem:[#allocation5] sm:$0x1]
    %v53 = vld [vmem:[%s0] sm:$0xff]
    %v54 = vld [vmem:[%s1] sm:$0xff]
    %vm55 = vcmask 31744
    %v57 = vsel %vm55, %v54, 0
    %vm59 = vcmask 1043456
    %v61 = vsel %vm59, %v51, 0
    %63 = vmatpush.msra.mxu0 0.0
    %64 = vmatpush.msra.mxu0 0.0
    %65 = vmatpush.msra.mxu0 0.0
    %66 = vmatpush.msra.mxu0 0.0
    %67 = vmatpush.msra.mxu0 0.0
    %68 = vmatpush.msra.mxu0 0.0
    %69 = vmatpush.msra.mxu0 0.0
    %70 = vmatpush.msra.mxu0 0.0
    %71 = vmatpush.msra.mxu0 0.0
    %72 = vmatpush.msra.mxu0 0.0
    %73 = vmatpush.msra.mxu0 0.0
    %74 = vmatpush.msra.mxu0 0.0
    %75 = vmatpush.msra.mxu0 0.0
    %76 = vmatpush.msra.mxu0 0.0
    %77 = vmatpush.msra.mxu0 0.0
    %78 = vmatpush.msra.mxu0 %v61
    %79 = vmatmul.f32.gmra.mxu0 %v57
    %v80 = vpop.f32.mrf.mxu0
    %v81 = vadd.f32 0.0, %v80
    %82 = vdwg.mxu0
    %vm83 = vcmask 64512
    %v85 = vsel %vm83, %v53, 0
    %87 = vmatpush.msra.mxu0 0.0
    %88 = vmatpush.msra.mxu0 0.0
    %89 = vmatpush.msra.mxu0 0.0
    %90 = vmatpush.msra.mxu0 0.0
    %91 = vmatpush.msra.mxu0 0.0
    %92 = vmatpush.msra.mxu0 0.0
    %93 = vmatpush.msra.mxu0 0.0
    %94 = vmatpush.msra.mxu0 0.0
    %95 = vmatpush.msra.mxu0 0.0
    %96 = vmatpush.msra.mxu0 0.0
    %97 = vmatpush.msra.mxu0 0.0
    %98 = vmatpush.msra.mxu0 0.0
    %99 = vmatpush.msra.mxu0 0.0
    %100 = vmatpush.msra.mxu0 0.0
    %101 = vmatpush.msra.mxu0 0.0
    %102 = vmatpush.msra.mxu0 %v50
    %103 = vmatmul.f32.gmra.mxu0 %v85
    %v104 = vpop.f32.mrf.mxu0
    %v105 = vadd.f32 %v81, %v104
    %106 = vdwg.mxu0
    %v107 = vperm.slane %v52, 0
    %v108 = vadd.f32 %v105, %v107
    %v109 = vmax.f32 %v108, 0.0
    %v110 = vld [vmem:[#allocation2 + $0x10] sm:$0xff]
    %v111 = vld [vmem:[#allocation2 + $0x18] sm:$0xff]
    %v112 = vld [vmem:[#allocation2 + $0x20] sm:$0xff]
    %v113 = vld [vmem:[#allocation2 + $0x28] sm:$0xff]
    %v114 = vld [vmem:[#allocation2 + $0x30] sm:$0xff]
    %v115 = vld [vmem:[#allocation2 + $0x38] sm:$0xff]
    %v116 = vld [vmem:[#allocation2 + $0x40] sm:$0xff]
    %v117 = vld [vmem:[#allocation2 + $0x48] sm:$0xff]
    %v118 = vld [vmem:[#allocation2 + $0x50] sm:$0xff]
    %v119 = vld [vmem:[#allocation2 + $0x58] sm:$0xff]
    %v120 = vld [vmem:[#allocation2 + $0x60] sm:$0xff]
    %v121 = vld [vmem:[#allocation2 + $0x68] sm:$0xff]
    %v122 = vld [vmem:[#allocation2 + $0x70] sm:$0xff]
    %v123 = vld [vmem:[#allocation2 + $0x78] sm:$0xff]
    %v124 = vld [vmem:[#allocation2 + $0x80] sm:$0xff]
    %v125 = vld [vmem:[#allocation2 + $0x88] sm:$0xff]
    %v126 = vld [vmem:[#allocation5 + $0x8] sm:$0x1]
    %v127 = vperm.slane %v126, 0
    %128 = vmatpush.msra.mxu0 %v125
    %129 = vmatpush.msra.mxu0 %v124
    %130 = vmatpush.msra.mxu0 %v123
    %131 = vmatpush.msra.mxu0 %v122
    %132 = vmatpush.msra.mxu0 %v121
    %133 = vmatpush.msra.mxu0 %v120
    %134 = vmatpush.msra.mxu0 %v119
    %135 = vmatpush.msra.mxu0 %v118
    %136 = vmatpush.msra.mxu0 %v117
    %137 = vmatpush.msra.mxu0 %v116
    %138 = vmatpush.msra.mxu0 %v115
    %139 = vmatpush.msra.mxu0 %v114
    %140 = vmatpush.msra.mxu0 %v113
    %141 = vmatpush.msra.mxu0 %v112
    %142 = vmatpush.msra.mxu0 %v111
    %143 = vmatpush.msra.mxu0 %v110
    %144 = vmatmul.f32.gmra.mxu0 %v109
    %v145 = vpop.f32.mrf.mxu0
    %v146 = vadd.f32 %v127, %v145
    %147 = vdwg.mxu0
    %v148 = vmax.f32 %v146, 0.0
    %v149 = vld [vmem:[#allocation5 + $0x10] sm:$0x1]
    %v150 = vld [vmem:[#allocation5 + $0x18] sm:$0x1]
    %v151 = vperm.slane %v149, 0
    %v152 = vmul.f32 %v148, %v151
    %153 = vadd.xlane.f32.xlu0 %v152
    %v154 = vpop.xlane.xlu0 %153
    %156 = vset.pattern.permute.xlu0 0
    %157 = vperm.xlu0 %156, %v150
    %v158 = vpop.permute.xlu0 %157
    %v159 = vperm.slane %v158, 0
    %v161 = vadd.f32 %v154, %v159
    %163 = vset.pattern.permute.xlu0 0
    %164 = vperm.xlu0 %163, %v161
    %v165 = vpop.permute.xlu0 %164
    %v166 = vlaneseq
    %v167 = vand.u32 %v166, 127
    %v168 = vperm.slane %v165, %v167
    %vm170 = vcmask 57344
    %171 = vst.msk [vmem:[#allocation7] sm:$0x1] %vm170, %v168
    // Predicated region
    $region26: #{tpu_custom_call.1} parent=1 // pred_check
      _
    $region27: #{tpu_custom_call.1} parent=1 // pred_check_branch
      %173 = sbr.rel (0) target = $region29
    $region28: #{tpu_custom_call.1} parent=1 // pred_region
      %175 = vsyncadd [#allocation4], 0
      %s177 = sshll.u32 [#allocation7], 4
      %s178 = int_to_ptr.vmem [resolvable:$true] %s177
      %s179 = sshll.u32 %s4, 4
      %s180 = int_to_ptr.hbm [resolvable:$true] %s179
      %182 = dma.vmem_to_hbm [thread:$0]  %s178, 16, %s180, [#allocation4]
    $region29: #{tpu_custom_call.1} parent=1 // pred_fallthru
      _
    // Predicated region
    $region30: #{tpu_custom_call.1} parent=1 // pred_check
      _
    $region31: #{tpu_custom_call.1} parent=1 // pred_check_branch
      %184 = sbr.rel (0) target = $region33
    $region32: #{tpu_custom_call.1} parent=1 // pred_region
      %186 = dma.done [#allocation4], 16
    $region33: #{tpu_custom_call.1} parent=1 // pred_fallthru
      _
    %187 = vsyncpa [#allocation3], 1
    %188 = vsyncpa [#allocation6], 1
    %189 = vsyncpa [#allocation4], 1

</llo_original>
